<compile_context>
chip_gen: v7x
topology: tpu7x:2x2x1
jax: 0.10.0
libtpu: 0.0.40
codegen_flags: <defaults>
</compile_context>

<pallas_src>
import functools

import jax
import jax.numpy as jnp
from jax.experimental import pallas as pl
from jax.experimental.pallas import tpu as pltpu

# small, module-consistent shapes: seq, batch, hidden, num_classes
S, B, H, C = 8, 2, 32, 8

LANE = 128     # lane width of a vreg
SUBLANE = 8    # sublane count of a vreg


def _round_up(x, m):
    return (x + m - 1) // m * m


# ---------------- fused Pallas kernel ----------------

def fused_linear_ce_kernel(x_ref, w_ref, b_ref, tgt_ref, logits_ref, loss_ref,
                           *, num_classes):
    # x:      (RT, H)   f32
    # w:      (H,  Cp)  f32   (class-padded)
    # b:      (1,  Cp)  f32
    # tgt:    (RT, 1)   i32
    # logits: (RT, Cp)  f32  (output; padded classes sliced off in wrapper)
    # loss:   (RT, 1)   f32  (output)
    logits = (
        jnp.dot(x_ref[...], w_ref[...], preferred_element_type=jnp.float32)
        + b_ref[...]
    )
    logits_ref[...] = logits

    # class index per lane (class axis is last => lane-dense)
    cls = jax.lax.broadcasted_iota(jnp.int32, logits.shape, 1)       # (RT, Cp)
    valid = cls < num_classes
    masked = jnp.where(valid, logits, jnp.float32(-1e30))

    # numerically stable log-sum-exp over the class (lane) axis, all in f32
    m = jnp.max(masked, axis=-1, keepdims=True)                      # (RT, 1)
    lse = jnp.log(jnp.sum(jnp.exp(masked - m), axis=-1, keepdims=True)) + m

    # pick the target-class logit via a lane-iota compare (no dynamic gather)
    tgt = tgt_ref[...]                                               # (RT, 1)
    tgt_logit = jnp.sum(jnp.where(cls == tgt, logits, 0.0),
                        axis=-1, keepdims=True)                      # (RT, 1)

    loss_ref[...] = lse - tgt_logit


def _fused_linear_ce(x2d, w, b, tgt_rows):
    """x2d: (R, H), w: (H, C), b: (1, C), tgt_rows: (R,) int -> (logits (R, C), loss (R,))."""
    R, Hdim = x2d.shape
    Cdim = w.shape[1]

    # lane-dense class padding; modest row tile (halve for v7x's 64 MiB VMEM if
    # rows_tile x Cp f32 double-buffered starts to approach the scoped limit).
    Cp = _round_up(Cdim, LANE)
    row_tile = 256 if R >= 256 else _round_up(R, SUBLANE)
    Rp = _round_up(R, row_tile)

    x_p = jnp.zeros((Rp, Hdim), jnp.float32).at[:R].set(x2d.astype(jnp.float32))
    w_p = jnp.zeros((Hdim, Cp), jnp.float32).at[:, :Cdim].set(w.astype(jnp.float32))
    b_p = jnp.zeros((1, Cp), jnp.float32).at[:, :Cdim].set(b.astype(jnp.float32))
    t_p = jnp.zeros((Rp, 1), jnp.int32).at[:R, 0].set(tgt_rows.astype(jnp.int32))

    kernel = functools.partial(fused_linear_ce_kernel, num_classes=Cdim)

    logits_p, loss_p = pl.pallas_call(
        kernel,
        out_shape=(jax.ShapeDtypeStruct((Rp, Cp), jnp.float32),
                   jax.ShapeDtypeStruct((Rp, 1), jnp.float32)),
        grid_spec=pltpu.PrefetchScalarGridSpec(
            num_scalar_prefetch=0,
            grid=(Rp // row_tile,),
            in_specs=[
                pl.BlockSpec((row_tile, Hdim), lambda i: (i, 0)),   # activations
                pl.BlockSpec((Hdim, Cp), lambda i: (0, 0)),         # weights (resident)
                pl.BlockSpec((1, Cp), lambda i: (0, 0)),            # bias (resident)
                pl.BlockSpec((row_tile, 1), lambda i: (i, 0)),      # targets
            ],
            out_specs=[
                pl.BlockSpec((row_tile, Cp), lambda i: (i, 0)),     # logits
                pl.BlockSpec((row_tile, 1), lambda i: (i, 0)),      # loss
            ],
        ),
        compiler_params=pltpu.CompilerParams(
            dimension_semantics=("parallel",)),                     # v7x: shard rows over 2 TCs
    )(x_p, w_p, b_p, t_p)

    return logits_p[:R, :Cdim], loss_p[:R, 0]


# ---------------- model + loss wrappers ----------------

class LinearModel:
    """Tiny linear 'model': (S, B, H) -> (S, B, C)."""

    def __init__(self, w, b):
        self.w = w  # (H, C)
        self.b = b  # (1, C)

    def __call__(self, inputs):
        s, bsz, h = inputs.shape
        out = jnp.dot(inputs.reshape(s * bsz, h), self.w,
                      precision=jax.lax.Precision.HIGHEST) + self.b
        return out.reshape(s, bsz, -1)


def compute_loss_pos(model, inputs, targets):
    """Fused forward: pred_targets = model(inputs).permute(1,2,0); loss = CE(pred_targets, targets)."""
    s, bsz, h = inputs.shape
    c = model.w.shape[1]

    x2d = inputs.reshape(s * bsz, h)
    # row r = s_idx * B + b_idx  <->  targets[b_idx, s_idx]
    tgt_rows = jnp.transpose(targets).reshape(s * bsz)

    logits, loss_rows = _fused_linear_ce(x2d, model.w, model.b, tgt_rows)

    # wrapper-side layout glue only for the returned values (module semantics)
    pred_targets = jnp.transpose(logits.reshape(s, bsz, c), (1, 2, 0))  # (B, C, S)
    loss = jnp.transpose(loss_rows.reshape(s, bsz))                     # (B, S)
    return loss, pred_targets


# ---------------- reference (pure JAX) ----------------

def _ref_loss(pred_targets, targets, num_classes):
    # pred_targets: (B, C, S), targets: (B, S)
    logp = jax.nn.log_softmax(pred_targets, axis=1)
    onehot = jax.nn.one_hot(targets, num_classes, axis=1, dtype=logp.dtype)
    return -jnp.sum(onehot * logp, axis=1)                              # (B, S)


if __name__ == "__main__":
    key = jax.random.PRNGKey(0)
    k_in, k_w, k_b, k_t = jax.random.split(key, 4)

    inputs = jax.random.normal(k_in, (S, B, H), dtype=jnp.float32)
    w = jax.random.normal(k_w, (H, C), dtype=jnp.float32) * 0.1
    b = jax.random.normal(k_b, (1, C), dtype=jnp.float32) * 0.1
    targets = jax.random.randint(k_t, (B, S), 0, C, dtype=jnp.int32)

    model = LinearModel(w, b)
    loss, pred_targets = compute_loss_pos(model, inputs, targets)
    loss = jax.block_until_ready(loss)
    pred_targets = jax.block_until_ready(pred_targets)

    assert loss.shape == (B, S) and loss.dtype == jnp.float32
    assert pred_targets.shape == (B, C, S)

    # logits from the fused kernel must match the plain linear model
    pred_ref = jnp.transpose(model(inputs), (1, 2, 0))
    assert jnp.allclose(pred_targets, pred_ref, atol=1e-3, rtol=1e-3), "logits mismatch"

    # per-position CE must match the reference computed from the same logits
    ref = _ref_loss(pred_targets, targets, C)
    assert jnp.allclose(loss, ref, atol=1e-4, rtol=1e-4), "loss mismatch vs reference"

    print("KERNEL_OK")
</pallas_src>

<mosaic_0001>
module attributes {stable_mosaic.version = 11 : i64} {
  func.func @fused_linear_ce_kernel(%arg0: i32, %arg1: memref<16x32xf32, #tpu.memory_space<vmem>>, %arg2: memref<32x128xf32, #tpu.memory_space<vmem>>, %arg3: memref<1x128xf32, #tpu.memory_space<vmem>>, %arg4: memref<16x1xi32, #tpu.memory_space<vmem>>, %arg5: memref<16x128xf32, #tpu.memory_space<vmem>>, %arg6: memref<16x1xf32, #tpu.memory_space<vmem>>) attributes {dimension_semantics = [#tpu.dimension_semantics<parallel>], iteration_bounds = array<i64: 1>, scalar_prefetch = 0 : i64, scratch_operands = 0 : i64, tpu.core_type = #tpu.core_type<tc>, window_params = [{transform_indices = @transform_0, window_bounds = array<i64: 16, 32>}, {pipeline_mode = #tpu.pipeline_mode<synchronous>, transform_indices = @transform_1, window_bounds = array<i64: 32, 128>}, {pipeline_mode = #tpu.pipeline_mode<synchronous>, transform_indices = @transform_2, window_bounds = array<i64: 1, 128>}, {transform_indices = @transform_3, window_bounds = array<i64: 16, 1>}, {transform_indices = @transform_4, window_bounds = array<i64: 16, 128>}, {transform_indices = @transform_5, window_bounds = array<i64: 16, 1>}]} {
    %c0 = arith.constant 0 : index
    %c0_0 = arith.constant 0 : index
    %0 = vector.load %arg1[%c0, %c0_0] : memref<16x32xf32, #tpu.memory_space<vmem>>, vector<16x32xf32>
    %c0_1 = arith.constant 0 : index
    %c0_2 = arith.constant 0 : index
    %1 = vector.load %arg2[%c0_1, %c0_2] : memref<32x128xf32, #tpu.memory_space<vmem>>, vector<32x128xf32>
    %cst = arith.constant dense<0.000000e+00> : vector<16x128xf32>
    %2 = tpu.matmul %0, %1, %cst {dimension_numbers = #tpu.dot_dimension_numbers<[1], [0], [0], [1], [0, 0, 1, 1], [], []>} : vector<16x32xf32>, vector<32x128xf32>, vector<16x128xf32> -> vector<16x128xf32>
    %c0_3 = arith.constant 0 : index
    %c0_4 = arith.constant 0 : index
    %3 = vector.load %arg3[%c0_3, %c0_4] : memref<1x128xf32, #tpu.memory_space<vmem>>, vector<1x128xf32>
    %4 = vector.broadcast %3 : vector<1x128xf32> to vector<16x128xf32>
    %5 = arith.addf %2, %4 : vector<16x128xf32>
    %c0_5 = arith.constant 0 : index
    %c0_6 = arith.constant 0 : index
    %6 = vector.load %arg5[%c0_5, %c0_6] : memref<16x128xf32, #tpu.memory_space<vmem>>, vector<16x128xf32>
    tpu.vector_store %arg5[%c0_5, %c0_6], %5 {strides = array<i32>} : memref<16x128xf32, #tpu.memory_space<vmem>>, vector<16x128xf32>,
    %7 = tpu.iota {dimensions = array<i32: 1>} : vector<16x128xi32>
    %c8_i32 = arith.constant 8 : i32
    %8 = vector.broadcast %c8_i32 : i32 to vector<16x128xi32>
    %9 = arith.cmpi slt, %7, %8 : vector<16x128xi32>
    %cst_7 = arith.constant -1.000000e+30 : f32
    %10 = vector.broadcast %cst_7 : f32 to vector<16x128xf32>
    %11 = arith.select %9, %5, %10 : vector<16x128xi1>, vector<16x128xf32>
    %cst_8 = arith.constant dense<0xFF800000> : vector<16xf32>
    %12 = vector.multi_reduction <maximumf>, %11, %cst_8 [1] : vector<16x128xf32> to vector<16xf32>
    %13 = vector.shape_cast %12 : vector<16xf32> to vector<16x1xf32>
    %14 = vector.broadcast %13 : vector<16x1xf32> to vector<16x128xf32>
    %15 = arith.subf %11, %14 : vector<16x128xf32>
    %16 = math.exp %15 : vector<16x128xf32>
    %cst_9 = arith.constant dense<0.000000e+00> : vector<16xf32>
    %17 = vector.multi_reduction <add>, %16, %cst_9 [1] : vector<16x128xf32> to vector<16xf32>
    %18 = vector.shape_cast %17 : vector<16xf32> to vector<16x1xf32>
    %19 = math.log %18 : vector<16x1xf32>
    %20 = arith.addf %19, %13 : vector<16x1xf32>
    %c0_10 = arith.constant 0 : index
    %c0_11 = arith.constant 0 : index
    %21 = vector.load %arg4[%c0_10, %c0_11] : memref<16x1xi32, #tpu.memory_space<vmem>>, vector<16x1xi32>
    %22 = vector.broadcast %21 : vector<16x1xi32> to vector<16x128xi32>
    %23 = arith.cmpi eq, %7, %22 : vector<16x128xi32>
    %cst_12 = arith.constant 0.000000e+00 : f32
    %24 = vector.broadcast %cst_12 : f32 to vector<16x128xf32>
    %25 = arith.select %23, %5, %24 : vector<16x128xi1>, vector<16x128xf32>
    %cst_13 = arith.constant dense<0.000000e+00> : vector<16xf32>
    %26 = vector.multi_reduction <add>, %25, %cst_13 [1] : vector<16x128xf32> to vector<16xf32>
    %27 = vector.shape_cast %26 : vector<16xf32> to vector<16x1xf32>
    %28 = arith.subf %20, %27 : vector<16x1xf32>
    %c0_14 = arith.constant 0 : index
    %c0_15 = arith.constant 0 : index
    %29 = vector.load %arg6[%c0_14, %c0_15] : memref<16x1xf32, #tpu.memory_space<vmem>>, vector<16x1xf32>
    tpu.vector_store %arg6[%c0_14, %c0_15], %28 {strides = array<i32>} : memref<16x1xf32, #tpu.memory_space<vmem>>, vector<16x1xf32>,
    return
  }
  func.func @transform_0(%arg0: i32) -> (i32, i32) {
    %c0_i32 = arith.constant 0 : i32
    %c0_i32_0 = arith.constant 0 : i32
    return %arg0, %c0_i32 : i32, i32
  }
  func.func @transform_1(%arg0: i32) -> (i32, i32) {
    %c0_i32 = arith.constant 0 : i32
    %c0_i32_0 = arith.constant 0 : i32
    %c0_i32_1 = arith.constant 0 : i32
    return %c0_i32, %c0_i32_0 : i32, i32
  }
  func.func @transform_2(%arg0: i32) -> (i32, i32) {
    %c0_i32 = arith.constant 0 : i32
    %c0_i32_0 = arith.constant 0 : i32
    %c0_i32_1 = arith.constant 0 : i32
    return %c0_i32, %c0_i32_0 : i32, i32
  }
  func.func @transform_3(%arg0: i32) -> (i32, i32) {
    %c0_i32 = arith.constant 0 : i32
    %c0_i32_0 = arith.constant 0 : i32
    return %arg0, %c0_i32 : i32, i32
  }
  func.func @transform_4(%arg0: i32) -> (i32, i32) {
    %c0_i32 = arith.constant 0 : i32
    %c0_i32_0 = arith.constant 0 : i32
    return %arg0, %c0_i32 : i32, i32
  }
  func.func @transform_5(%arg0: i32) -> (i32, i32) {
    %c0_i32 = arith.constant 0 : i32
    %c0_i32_0 = arith.constant 0 : i32
    return %arg0, %c0_i32 : i32, i32
  }
}

</mosaic_0001>

<llo_original>
// kernel: tpu_custom_call.1
$region0: #{tpu_custom_call.1}
  #allocation0 [shape = 'u32[]', space=smem, size = 0x4, offset = 0x4, fixed_abs, tag = 'smem constant byte address 0x4 - core index']
  #allocation1 [shape = 'u32[144,128]{1,0:T(1,128)}', space=vmem, size = 0x12000, scoped, tag = 'internal scratch']
  %s0 = inlined_call_operand.vmem [shape: f32[16,32], index: 0, kind: input, shape index: {}]
  %s1 = inlined_call_operand.hbm [shape: f32[32,128], index: 1, kind: input, shape index: {}]
  %s2 = inlined_call_operand.vmem [shape: f32[1,128], index: 2, kind: input, shape index: {}]
  %s3 = inlined_call_operand.vmem [shape: s32[16,1], index: 3, kind: input, shape index: {}]
  %s4 = inlined_call_operand.hbm [shape: f32[16,128], index: 4, kind: output, shape index: {0}]
  %s5 = inlined_call_operand.vmem [shape: f32[16,1], index: 5, kind: output, shape index: {1}]
  %6 = xla_tuple %s4, %s5
  %s7 = sld [smem:[#allocation0]]
  $region38: #{tpu_custom_call.1} parent=0
    _
  %s9 = ssub.s32 1, %s7
  %s10 = scalar_select 0, %s9, %s7
  $region1: #{tpu_custom_call.1} parent=0
    #allocation2 [shape = 'u8[16384]{0}', space=vmem, size = 0x4000, scoped, tag = 'input window, operand 1, single buffered']
    #allocation3 [shape = 's32[1]{0}', space=sflag, size = 0x4, scoped, tag = 'scoped memory for tpu_custom_call.1']
    #allocation4 [shape = 's32[1]{0}', space=sflag, size = 0x4, scoped, tag = 'scoped memory for tpu_custom_call.1']
    #allocation5 [shape = 'u8[8192]{0}', space=vmem, size = 0x2000, scoped, tag = 'output window, operand 0, single buffered']
    %11 = vsyncpa [#allocation3], 0
    %12 = vsyncpa [#allocation4], 0
    // Predicated region
    $region2: #{tpu_custom_call.1} parent=1 // pred_check
      _
    $region3: #{tpu_custom_call.1} parent=1 // pred_check_branch
      %14 = sbr.rel (0) target = $region5
    $region4: #{tpu_custom_call.1} parent=1 // pred_region
      _
    $region5: #{tpu_custom_call.1} parent=1 // pred_fallthru
      _
    // Predicated region
    $region6: #{tpu_custom_call.1} parent=1 // pred_check
      _
    $region7: #{tpu_custom_call.1} parent=1 // pred_check_branch
      %16 = sbr.rel (0) target = $region9
    $region8: #{tpu_custom_call.1} parent=1 // pred_region
      %s18 = ssub.s32 512, 512
      %19 = vsyncadd [#allocation3], %s18
      %s20 = sshll.u32 [#allocation2], 4
      %s21 = int_to_ptr.vmem [resolvable:$true] %s20
      %26 = dma.hbm_to_vmem [thread:$0]  %s1, 512, %s21, [#allocation3], 128, 128, 8
    $region9: #{tpu_custom_call.1} parent=1 // pred_fallthru
      _
    // Predicated region
    $region10: #{tpu_custom_call.1} parent=1 // pred_check
      _
    $region11: #{tpu_custom_call.1} parent=1 // pred_check_branch
      %28 = sbr.rel (0) target = $region13
    $region12: #{tpu_custom_call.1} parent=1 // pred_region
      _
    $region13: #{tpu_custom_call.1} parent=1 // pred_fallthru
      _
    // Predicated region
    $region14: #{tpu_custom_call.1} parent=1 // pred_check
      _
    $region15: #{tpu_custom_call.1} parent=1 // pred_check_branch
      %30 = sbr.rel (0) target = $region17
    $region16: #{tpu_custom_call.1} parent=1 // pred_region
      _
    $region17: #{tpu_custom_call.1} parent=1 // pred_fallthru
      _
    // Predicated region
    $region18: #{tpu_custom_call.1} parent=1 // pred_check
      _
    $region19: #{tpu_custom_call.1} parent=1 // pred_check_branch
      %32 = sbr.rel (0) target = $region21
    $region20: #{tpu_custom_call.1} parent=1 // pred_region
      %33 = dma.done [#allocation3], 512
    $region21: #{tpu_custom_call.1} parent=1 // pred_fallthru
      _
    %v34 = vld [vmem:[%s0] sm:$0xff]
    %v35 = vld [vmem:[%s0 + $0x8] sm:$0xff]
    %v36 = vld [vmem:[#allocation2] sm:$0xff]
    %v37 = vld [vmem:[#allocation2 + $0x8] sm:$0xff]
    %v38 = vld [vmem:[#allocation2 + $0x10] sm:$0xff]
    %v39 = vld [vmem:[#allocation2 + $0x18] sm:$0xff]
    %v40 = vld [vmem:[%s2] sm:$0x1]
    %v42 = vlaneseq
    %v43 = vshrl.u32 %v42, 7
    %v44 = vsub.s32 0, %v43
    %v45 = vrot.slane %v40, %v44
    %vm47 = vcmask 261120
    %v49 = vsel %vm47, %v34, 0
    %v52 = vsel %vm47, %v35, 0
    %54 = vmatprep.subr.mxu0 0.0
    %55 = vmatpush1.msra.mxu0 %v36
    %56 = vmatprep.subr.mxu0 0.0
    %57 = vmatpush1.msra.mxu0 %v37
    %58 = vmatprep.subr.mxu0 0.0
    %59 = vmatpush1.msra.mxu0 %v38
    %60 = vmatprep.subr.mxu0 0.0
    %61 = vmatpush1.msra.mxu0 %v39
    %62 = vmatprep.subr.mxu0 0.0
    %63 = vmatpush1.msra.mxu0 0.0
    %64 = vmatprep.subr.mxu0 0.0
    %65 = vmatpush1.msra.mxu0 0.0
    %66 = vmatprep.subr.mxu0 0.0
    %67 = vmatpush1.msra.mxu0 0.0
    %68 = vmatprep.subr.mxu0 0.0
    %69 = vmatpush1.msra.mxu0 0.0
    %70 = vmatprep.subr.mxu0 0.0
    %71 = vmatpush1.msra.mxu0 0.0
    %72 = vmatprep.subr.mxu0 0.0
    %73 = vmatpush1.msra.mxu0 0.0
    %74 = vmatprep.subr.mxu0 0.0
    %75 = vmatpush1.msra.mxu0 0.0
    %76 = vmatprep.subr.mxu0 0.0
    %77 = vmatpush1.msra.mxu0 0.0
    %78 = vmatprep.subr.mxu0 0.0
    %79 = vmatpush1.msra.mxu0 0.0
    %80 = vmatprep.subr.mxu0 0.0
    %81 = vmatpush1.msra.mxu0 0.0
    %82 = vmatprep.subr.mxu0 0.0
    %83 = vmatpush1.msra.mxu0 0.0
    %84 = vmatprep.subr.mxu0 0.0
    %85 = vmatpush1.msra.mxu0 0.0
    %86 = vmatprep.subr.mxu0 0.0
    %87 = vmatpush1.msra.mxu0 0.0
    %88 = vmatprep.subr.mxu0 0.0
    %89 = vmatpush1.msra.mxu0 0.0
    %90 = vmatprep.subr.mxu0 0.0
    %91 = vmatpush1.msra.mxu0 0.0
    %92 = vmatprep.subr.mxu0 0.0
    %93 = vmatpush1.msra.mxu0 0.0
    %94 = vmatprep.subr.mxu0 0.0
    %95 = vmatpush1.msra.mxu0 0.0
    %96 = vmatprep.subr.mxu0 0.0
    %97 = vmatpush1.msra.mxu0 0.0
    %98 = vmatprep.subr.mxu0 0.0
    %99 = vmatpush1.msra.mxu0 0.0
    %100 = vmatprep.subr.mxu0 0.0
    %101 = vmatpush1.msra.mxu0 0.0
    %102 = vmatprep.subr.mxu0 0.0
    %103 = vmatpush1.msra.mxu0 0.0
    %104 = vmatprep.subr.mxu0 0.0
    %105 = vmatpush1.msra.mxu0 0.0
    %106 = vmatprep.subr.mxu0 0.0
    %107 = vmatpush1.msra.mxu0 0.0
    %108 = vmatprep.subr.mxu0 0.0
    %109 = vmatpush1.msra.mxu0 0.0
    %110 = vmatprep.subr.mxu0 0.0
    %111 = vmatpush1.msra.mxu0 0.0
    %112 = vmatprep.subr.mxu0 0.0
    %113 = vmatpush1.msra.mxu0 0.0
    %114 = vmatprep.subr.mxu0 0.0
    %115 = vmatpush1.msra.mxu0 0.0
    %116 = vmatprep.subr.mxu0 0.0
    %117 = vmatpush1.msra.mxu0 0.0
    %118 = vmatprep.mubr.f32.mxu0 0.0
    %119 = vmatmul.mubr.f32.gmra.mrb[0].mxu0 %v49
    %v120 = vpop.f32.mrb[0].mxu0
    %v121 = vadd.f32 %v45, %v120
    %v122 = vpop.f32.mrb[0].mxu0
    %123 = vmatprep.mubr.f32.mxu0 0.0
    %124 = vmatmul.mubr.f32.gmra.mrb[0].mxu0 %v52
    %v125 = vpop.f32.mrb[0].mxu0
    %v126 = vadd.f32 %v45, %v125
    %v127 = vpop.f32.mrb[0].mxu0
    %128 = vdwg.mxu0
    %129 = vst [vmem:[#allocation5] sm:$0xff] %v121
    %130 = vst [vmem:[#allocation5 + $0x8] sm:$0xff] %v126
    %v131 = vlaneseq
    %v132 = vand.u32 %v131, 127
    %vm133 = vcmp.lt.s32.totalorder %v132, 8
    %v134 = vsel %vm133, %v121, -1e+30
    %v135 = vsel %vm133, %v126, -1e+30
    %136 = vmax.xlane.f32.xlu0 %v134
    %v137 = vpop.xlane.xlu0 %136
    %138 = vmax.xlane.f32.xlu0 %v135
    %v139 = vpop.xlane.xlu0 %138
    %v140 = vsub.f32 %v134, %v137
    %v141 = vsub.f32 %v135, %v139
    %v142 = vmul.f32 %v140, 1.442695
    %v143 = vpow.pop %v142
    %v144 = vmul.f32 %v141, 1.442695
    %v145 = vpow.pop %v144
    %146 = vadd.xlane.f32.xlu0 %v143
    %v147 = vpop.xlane.xlu0 %146
    %148 = vadd.xlane.f32.xlu0 %v145
    %v149 = vpop.xlane.xlu0 %148
    %v150 = vlog2.pop %v147
    %v151 = vmul.f32 %v150, 0.6931472
    %v152 = vlog2.pop %v149
    %v153 = vmul.f32 %v152, 0.6931472
    %v154 = vadd.f32 %v151, %v137
    %v155 = vadd.f32 %v153, %v139
    %v156 = vld [vmem:[%s3] sm:$0xff]
    %v157 = vld [vmem:[%s3 + $0x8] sm:$0xff]
    %158 = vset.pattern.permute.xlu0 0
    %159 = vperm.xlu0 %158, %v156
    %v160 = vpop.permute.xlu0 %159
    %161 = vset.pattern.permute.xlu0 0
    %162 = vperm.xlu0 %161, %v157
    %v163 = vpop.permute.xlu0 %162
    %vm164 = vcmp.eq.s32.totalorder %v132, %v160
    %vm165 = vcmp.eq.s32.totalorder %v132, %v163
    %v166 = vsel %vm164, %v121, 0.0
    %v167 = vsel %vm165, %v126, 0.0
    %168 = vadd.xlane.f32.xlu0 %v166
    %v169 = vpop.xlane.xlu0 %168
    %170 = vadd.xlane.f32.xlu0 %v167
    %v171 = vpop.xlane.xlu0 %170
    %v172 = vsub.f32 %v154, %v169
    %v173 = vsub.f32 %v155, %v171
    %vm174 = vcmask 7168
    %175 = vst.msk [vmem:[%s5] sm:$0xff] %vm174, %v172
    %176 = vst.msk [vmem:[%s5 + $0x8] sm:$0xff] %vm174, %v173
    // Predicated region
    $region22: #{tpu_custom_call.1} parent=1 // pred_check
      _
    $region23: #{tpu_custom_call.1} parent=1 // pred_check_branch
      %178 = sbr.rel (0) target = $region25
    $region24: #{tpu_custom_call.1} parent=1 // pred_region
      %s180 = ssub.s32 256, 256
      %181 = vsyncadd [#allocation4], %s180
      %s182 = sshll.u32 [#allocation5], 4
      %s183 = int_to_ptr.vmem [resolvable:$true] %s182
      %188 = dma.vmem_to_hbm [thread:$0]  %s183, 256, %s4, [#allocation4], 128, 128, 8
    $region25: #{tpu_custom_call.1} parent=1 // pred_fallthru
      _
    // Predicated region
    $region26: #{tpu_custom_call.1} parent=1 // pred_check
      _
    $region27: #{tpu_custom_call.1} parent=1 // pred_check_branch
      %190 = sbr.rel (0) target = $region29
    $region28: #{tpu_custom_call.1} parent=1 // pred_region
      _
    $region29: #{tpu_custom_call.1} parent=1 // pred_fallthru
      _
    // Predicated region
    $region30: #{tpu_custom_call.1} parent=1 // pred_check
      _
    $region31: #{tpu_custom_call.1} parent=1 // pred_check_branch
      %192 = sbr.rel (0) target = $region33
    $region32: #{tpu_custom_call.1} parent=1 // pred_region
      %193 = dma.done [#allocation4], 256
    $region33: #{tpu_custom_call.1} parent=1 // pred_fallthru
      _
    // Predicated region
    $region34: #{tpu_custom_call.1} parent=1 // pred_check
      _
    $region35: #{tpu_custom_call.1} parent=1 // pred_check_branch
      %195 = sbr.rel (0) target = $region37
    $region36: #{tpu_custom_call.1} parent=1 // pred_region
      _
    $region37: #{tpu_custom_call.1} parent=1 // pred_fallthru
      _
    %196 = vsyncpa [#allocation3], 1
    %197 = vsyncpa [#allocation4], 1

</llo_original>
